<compile_context>
chip_gen: v5e
topology: v5e:2x2
jax: 0.10.0
libtpu: 0.0.40
codegen_flags: <defaults>
</compile_context>

<pallas_src>
import math

import jax
import jax.numpy as jnp
from jax import lax
from jax.experimental import pallas as pl
from jax.experimental.pallas import tpu as pltpu

_LOG2PI = math.log(2.0 * math.pi)
_VMEM_LIMIT = 32 * 1024 * 1024   # explicit scoped-VMEM budget (fits v7x 64 MiB)


def _cparams(n_grid_dims):
    return pltpu.CompilerParams(
        dimension_semantics=("parallel",) * n_grid_dims,
        vmem_limit_bytes=_VMEM_LIMIT,
    )


# ----------------------------------------------------------------------------- #
# Fused Conv1d kernel: per-tap MXU matmuls + bias + activation + masks in VMEM
# ----------------------------------------------------------------------------- #
_ACTS = {
    None: lambda x: x,
    "relu": lambda x: jnp.maximum(x, 0.0),
    "lrelu01": lambda x: jnp.where(x >= 0, x, 0.1 * x),
    "lrelu001": lambda x: jnp.where(x >= 0, x, 0.01 * x),
    "tanh": jnp.tanh,
}


def _make_conv_kernel(K, dilation, t_out, act, has_bias, has_in_mask,
                      has_out_mask, pre_act):
    gated = (act == "gated")
    act_fn = None if gated else _ACTS[act]
    pre_fn = _ACTS[pre_act]

    def kernel(*refs):
        i = 0
        x_ref = refs[i]; i += 1
        w_ref = refs[i]; i += 1
        b_ref = refs[i] if has_bias else None; i += int(has_bias)
        im_ref = refs[i] if has_in_mask else None; i += int(has_in_mask)
        om_ref = refs[i] if has_out_mask else None; i += int(has_out_mask)
        o_ref = refs[i]

        x = x_ref[0]                      # (Cin, Tp)  f32
        x = pre_fn(x)
        if has_in_mask:
            x = x * im_ref[0]             # (1, Tp) broadcast
        xb = x.astype(jnp.bfloat16)

        acc = None
        for k in range(K):                # static unroll over kernel taps
            start = k * dilation
            xk = xb[:, start:start + t_out]                 # (Cin, T_out)
            part = jnp.dot(w_ref[k], xk,                    # (Cout, Cin)@(Cin,T)
                           preferred_element_type=jnp.float32)
            acc = part if acc is None else acc + part

        if has_bias:
            acc = acc + b_ref[...]        # (Cout, 1) broadcast
        if gated:                         # fused_add_tanh_sigmoid_multiply (g=0)
            h = acc.shape[0] // 2
            acc = jnp.tanh(acc[:h]) * jax.nn.sigmoid(acc[h:])
        elif act is not None:
            acc = act_fn(acc)
        if has_out_mask:
            acc = acc * om_ref[0]         # (1, T_out) broadcast
        o_ref[0] = acc

    return kernel


def conv1d(x, w, b=None, *, padding=0, dilation=1, pad_lr=None,
           in_mask=None, out_mask=None, act=None, pre_act=None):
    """PyTorch-semantics Conv1d (stride 1) fused with bias/activation/mask.

    x: (B, Cin, T), w: (Cout, Cin, K).  Output layout (B, Cout, T_out): time is
    the lane axis so even Cout==1 projections stay lane-dense.
    """
    B, Cin, T = x.shape
    Cout, Cin2, K = w.shape
    assert Cin == Cin2
    if pad_lr is None:
        pad_lr = (padding, padding)
    pad_l, pad_r = pad_lr
    xp = jnp.pad(x, ((0, 0), (0, 0), (pad_l, pad_r))) if (pad_l or pad_r) else x
    Tp = xp.shape[-1]
    T_out = Tp - dilation * (K - 1)
    gated = (act == "gated")
    Cout_eff = Cout // 2 if gated else Cout

    wt = jnp.transpose(w, (2, 0, 1)).astype(jnp.bfloat16)   # (K, Cout, Cin)

    args = [xp.astype(jnp.float32), wt]
    in_specs = [
        pl.BlockSpec((1, Cin, Tp), lambda bi: (bi, 0, 0)),
        pl.BlockSpec((K, Cout, Cin), lambda bi: (0, 0, 0)),
    ]
    has_bias = b is not None
    if has_bias:
        args.append(b.reshape(Cout, 1).astype(jnp.float32))
        in_specs.append(pl.BlockSpec((Cout, 1), lambda bi: (0, 0)))
    has_in_mask = in_mask is not None
    if has_in_mask:
        imp = (jnp.pad(in_mask, ((0, 0), (0, 0), (pad_l, pad_r)))
               if (pad_l or pad_r) else in_mask)
        args.append(imp.astype(jnp.float32))
        in_specs.append(pl.BlockSpec((1, 1, Tp), lambda bi: (bi, 0, 0)))
    has_out_mask = out_mask is not None
    if has_out_mask:
        assert out_mask.shape[-1] == T_out
        args.append(out_mask.astype(jnp.float32))
        in_specs.append(pl.BlockSpec((1, 1, T_out), lambda bi: (bi, 0, 0)))

    kernel = _make_conv_kernel(K, dilation, T_out, act, has_bias,
                               has_in_mask, has_out_mask, pre_act)
    return pl.pallas_call(
        kernel,
        out_shape=jax.ShapeDtypeStruct((B, Cout_eff, T_out), jnp.float32),
        grid=(B,),
        in_specs=in_specs,
        out_specs=pl.BlockSpec((1, Cout_eff, T_out), lambda bi: (bi, 0, 0)),
        compiler_params=_cparams(1),
    )(*args)


def conv_transpose1d(x, w, b=None, *, stride=1, padding=0, pre_act=None):
    """PyTorch ConvTranspose1d via sub-pixel phase decomposition.

    w: (Cin, Cout, K).  Each output phase is a dense stride-1 fused conv, so the
    MXU never multiplies zero-stuffed samples.
    """
    B, Cin, T_in = x.shape
    Cin2, Cout, K = w.shape
    assert Cin == Cin2
    S, P = stride, padding
    T_out = (T_in - 1) * S - 2 * P + K
    assert T_out % S == 0, "phase decomposition assumes T_out divisible by stride"
    J = T_out // S

    phases = []
    for ph in range(S):
        r = (ph + P) % S
        taps = list(range(r, K, S))
        Kp = len(taps)
        assert Kp > 0
        cp = (ph + P) // S
        # out_ph[j] = sum_m x[j + cp - m] * w[:, :, taps[m]]  -> reorder so the
        # tap offsets are increasing and it becomes a standard correlation.
        w_sub = jnp.stack([w[:, :, taps[Kp - 1 - mp]] for mp in range(Kp)], axis=-1)
        w_sub = jnp.transpose(w_sub, (1, 0, 2))               # (Cout, Cin, Kp)
        lo = cp - (Kp - 1)                                     # first x index read
        hi = cp + J                                            # one past last read
        pad_l = max(0, -lo)
        pad_r = max(0, hi - T_in)
        xs = x[:, :, max(0, lo):min(T_in, hi)]
        out_ph = conv1d(xs, w_sub, b, pad_lr=(pad_l, pad_r), pre_act=pre_act)
        phases.append(out_ph)                                  # (B, Cout, J)
    return jnp.stack(phases, axis=-1).reshape(B, Cout, T_out)


# ----------------------------------------------------------------------------- #
# Fused multi-head attention kernel (QK^T + mask + softmax + PV per (b, head))
# ----------------------------------------------------------------------------- #
def _make_mha_kernel(scale):
    def kernel(q_ref, k_ref, v_ref, m_ref, o_ref):
        q = q_ref[0].astype(jnp.bfloat16)                 # (d, T)
        k = k_ref[0].astype(jnp.bfloat16)
        v = v_ref[0].astype(jnp.bfloat16)
        m = m_ref[0, 0]                                   # (T, T) f32
        dn_qk = (((0,), (0,)), ((), ()))                  # contract over d
        scores = lax.dot_general(q, k, dn_qk,
                                 preferred_element_type=jnp.float32) * scale
        scores = jnp.where(m > 0, scores, -1e4)           # keep mask/softmax in f32
        smax = jnp.max(scores, axis=-1, keepdims=True)
        p = jnp.exp(scores - smax)
        denom = jnp.sum(p, axis=-1, keepdims=True)
        p = p * pl.reciprocal(denom, approx=True)
        dn_pv = (((1,), (1,)), ((), ()))                  # contract over key axis
        out = lax.dot_general(v, p.astype(jnp.bfloat16), dn_pv,
                              preferred_element_type=jnp.float32)   # (d, Tq)
        o_ref[0] = out
    return kernel


def multi_head_attention(p, x, attn_mask, n_heads):
    # single fused QKV projection (one kernel, x read once)
    w_qkv = jnp.concatenate([p["q"]["w"], p["k"]["w"], p["v"]["w"]], axis=0)
    b_qkv = jnp.concatenate([p["q"]["b"], p["k"]["b"], p["v"]["b"]], axis=0)
    qkv = conv1d(x, w_qkv, b_qkv)
    q, k, v = jnp.split(qkv, 3, axis=1)
    B, C, T = q.shape
    d = C // n_heads
    assert d % 8 == 0, "head dim must be sublane-aligned"

    out = pl.pallas_call(
        _make_mha_kernel(1.0 / math.sqrt(d)),
        out_shape=jax.ShapeDtypeStruct((B, C, T), jnp.float32),
        grid=(B, n_heads),
        in_specs=[
            pl.BlockSpec((1, d, T), lambda b, h: (b, h, 0)),
            pl.BlockSpec((1, d, T), lambda b, h: (b, h, 0)),
            pl.BlockSpec((1, d, T), lambda b, h: (b, h, 0)),
            pl.BlockSpec((1, 1, T, T), lambda b, h: (b, 0, 0, 0)),
        ],
        out_specs=pl.BlockSpec((1, d, T), lambda b, h: (b, h, 0)),
        compiler_params=_cparams(2),
    )(q, k, v, attn_mask)
    return conv1d(out, p["o"]["w"], p["o"]["b"])


# ----------------------------------------------------------------------------- #
# Batched matmul + neg_cent kernels (alignment block)
# ----------------------------------------------------------------------------- #
def _bmm_kernel(a_ref, b_ref, o_ref):
    o_ref[0] = jnp.dot(a_ref[0], b_ref[0], preferred_element_type=jnp.float32)


def pallas_bmm(a, b):
    a = a.astype(jnp.float32)
    b = b.astype(jnp.float32)
    G, M, K = a.shape
    G2, K2, N = b.shape
    assert G == G2 and K == K2
    return pl.pallas_call(
        _bmm_kernel,
        out_shape=jax.ShapeDtypeStruct((G, M, N), jnp.float32),
        grid=(G,),
        in_specs=[
            pl.BlockSpec((1, M, K), lambda g: (g, 0, 0)),
            pl.BlockSpec((1, K, N), lambda g: (g, 0, 0)),
        ],
        out_specs=pl.BlockSpec((1, M, N), lambda g: (g, 0, 0)),
        compiler_params=_cparams(1),
    )(a, b)


def _neg_cent_kernel(zp_ref, mp_ref, logsp_ref, o_ref):
    zp = zp_ref[0]
    mp = mp_ref[0]
    logsp = logsp_ref[0]
    s = jnp.exp(-2.0 * logsp)                                     # (C, Tx)
    nc1 = jnp.sum(-0.5 * _LOG2PI - logsp, axis=0, keepdims=True)  # (1, Tx)
    dn = (((0,), (0,)), ((), ()))
    nc2 = lax.dot_general(-0.5 * zp * zp, s, dn, preferred_element_type=jnp.float32)
    nc3 = lax.dot_general(zp, mp * s, dn, preferred_element_type=jnp.float32)
    nc4 = jnp.sum(-0.5 * mp * mp * s, axis=0, keepdims=True)
    o_ref[0] = nc1 + nc2 + nc3 + nc4


def pallas_neg_cent(z_p, m_p, logs_p):
    B, C, Ty = z_p.shape
    _, _, Tx = m_p.shape
    return pl.pallas_call(
        _neg_cent_kernel,
        out_shape=jax.ShapeDtypeStruct((B, Ty, Tx), jnp.float32),
        grid=(B,),
        in_specs=[
            pl.BlockSpec((1, C, Ty), lambda b: (b, 0, 0)),
            pl.BlockSpec((1, C, Tx), lambda b: (b, 0, 0)),
            pl.BlockSpec((1, C, Tx), lambda b: (b, 0, 0)),
        ],
        out_specs=pl.BlockSpec((1, Ty, Tx), lambda b: (b, 0, 0)),
        compiler_params=_cparams(1),
    )(z_p.astype(jnp.float32), m_p.astype(jnp.float32), logs_p.astype(jnp.float32))


# ----------------------------------------------------------------------------- #
# Norm / mask helpers
# ----------------------------------------------------------------------------- #
def layer_norm_c(x, gamma, beta, eps=1e-5):
    mean = jnp.mean(x, axis=1, keepdims=True)
    var = jnp.mean((x - mean) ** 2, axis=1, keepdims=True)
    return (x - mean) / jnp.sqrt(var + eps) * gamma[None, :, None] + beta[None, :, None]


def sequence_mask(lengths, max_len):
    return (jnp.arange(max_len)[None, :] < lengths[:, None]).astype(jnp.float32)


# ----------------------------------------------------------------------------- #
# Sub-modules
# ----------------------------------------------------------------------------- #
def ffn(p, x, x_mask, kernel_size):
    pad = kernel_size // 2
    x = conv1d(x, p["c1"]["w"], p["c1"]["b"], padding=pad,
               in_mask=x_mask, act="relu")
    x = conv1d(x, p["c2"]["w"], p["c2"]["b"], padding=pad,
               in_mask=x_mask, out_mask=x_mask)
    return x


def attn_encoder(p, x, x_mask, n_heads, kernel_size):
    attn_mask = x_mask[:, :, None, :] * x_mask[:, :, :, None]   # (B,1,T,T)
    x = x * x_mask
    for layer in p["layers"]:
        y = multi_head_attention(layer["attn"], x, attn_mask, n_heads)
        x = layer_norm_c(x + y, layer["n1"]["g"], layer["n1"]["b"])
        y = ffn(layer["ffn"], x, x_mask, kernel_size)
        x = layer_norm_c(x + y, layer["n2"]["g"], layer["n2"]["b"])
    return x * x_mask


def text_encoder(p, tokens, x_lengths, cfg):
    h = cfg["hidden_channels"]
    x = jnp.take(p["emb"], tokens, axis=0) * math.sqrt(h)        # (B, T, H)
    x = x.transpose(0, 2, 1)                                     # (B, H, T)
    x_mask = sequence_mask(x_lengths, x.shape[-1])[:, None, :]
    x = attn_encoder(p["encoder"], x * x_mask, x_mask, cfg["n_heads"], cfg["kernel_size"])
    stats = conv1d(x, p["proj"]["w"], p["proj"]["b"], out_mask=x_mask)
    m, logs = jnp.split(stats, 2, axis=1)
    return x, m, logs, x_mask


def wn(p, x, x_mask, hidden):
    output = jnp.zeros_like(x)
    n_layers = len(p["in"])
    for i in range(n_layers):
        # dilated conv + gated tanh*sigmoid fused in one kernel
        acts = conv1d(x, p["in"][i]["w"], p["in"][i]["b"],
                      padding=p["pad"][i], dilation=p["dil"][i], act="gated")
        rs = conv1d(acts, p["rs"][i]["w"], p["rs"][i]["b"])
        if i < n_layers - 1:
            x = (x + rs[:, :hidden]) * x_mask
            output = output + rs[:, hidden:]
        else:
            output = output + rs
    return output * x_mask


def posterior_encoder(p, y, y_lengths, key, cfg):
    y_mask = sequence_mask(y_lengths, y.shape[-1])[:, None, :]
    x = conv1d(y, p["pre"]["w"], p["pre"]["b"], out_mask=y_mask)
    x = wn(p["wn"], x, y_mask, cfg["hidden_channels"])
    stats = conv1d(x, p["proj"]["w"], p["proj"]["b"], out_mask=y_mask)
    m, logs = jnp.split(stats, 2, axis=1)
    z = (m + jax.random.normal(key, m.shape, dtype=m.dtype) * jnp.exp(logs)) * y_mask
    return z, m, logs, y_mask


def coupling_layer(p, x, x_mask, hidden, half):
    x0, x1 = x[:, :half], x[:, half:]
    h = conv1d(x0, p["pre"]["w"], p["pre"]["b"], out_mask=x_mask)
    h = wn(p["wn"], h, x_mask, hidden)
    m = conv1d(h, p["post"]["w"], p["post"]["b"], out_mask=x_mask)   # mean_only
    x1 = (m + x1) * x_mask                                           # logs == 0
    return jnp.concatenate([x0, x1], axis=1)


def flow_forward(p, x, x_mask, cfg):
    half = cfg["inter_channels"] // 2
    for layer in p["layers"]:
        x = coupling_layer(layer, x, x_mask, cfg["hidden_channels"], half)
        x = jnp.flip(x, axis=1)                                      # modules.Flip
    return x


def duration_predictor(p, x, x_mask):
    x = lax.stop_gradient(x)
    x = conv1d(x, p["c1"]["w"], p["c1"]["b"], padding=1, in_mask=x_mask, act="relu")
    x = layer_norm_c(x, p["n1"]["g"], p["n1"]["b"])
    x = conv1d(x, p["c2"]["w"], p["c2"]["b"], padding=1, in_mask=x_mask, act="relu")
    x = layer_norm_c(x, p["n2"]["g"], p["n2"]["b"])
    x = conv1d(x, p["proj"]["w"], p["proj"]["b"], in_mask=x_mask, out_mask=x_mask)
    return x


def resblock2(p, x, kernel_size, dilations):
    for conv, d in zip(p["convs"], dilations):
        pad = (kernel_size * d - d) // 2
        xt = conv1d(x, conv["w"], conv["b"], padding=pad, dilation=d,
                    pre_act="lrelu01")
        x = xt + x
    return x


def generator(p, x, cfg):
    x = conv1d(x, p["pre"]["w"], p["pre"]["b"], padding=3)
    n_kernels = len(cfg["resblock_kernel_sizes"])
    for i, (u, k) in enumerate(zip(cfg["upsample_rates"], cfg["upsample_kernel_sizes"])):
        x = conv_transpose1d(x, p["ups"][i]["w"], p["ups"][i]["b"],
                             stride=u, padding=(k - u) // 2, pre_act="lrelu01")
        xs = None
        for j in range(n_kernels):
            rb = p["res"][i * n_kernels + j]
            r = resblock2(rb, x, cfg["resblock_kernel_sizes"][j],
                          cfg["resblock_dilation_sizes"][j])
            xs = r if xs is None else xs + r
        x = xs / n_kernels
    # final leaky_relu (slope 0.01) + conv + tanh fused into one kernel
    return conv1d(x, p["post"]["w"], None, padding=3, pre_act="lrelu001", act="tanh")


# ----------------------------------------------------------------------------- #
# monotonic_align.maximum_path: on-device batched DP (matches Cython reference)
# ----------------------------------------------------------------------------- #
def maximum_path(neg_cent, mask):
    neg_cent = neg_cent.astype(jnp.float32)
    mask = mask.astype(jnp.float32)
    B, Ty, Tx = neg_cent.shape
    NEG = jnp.float32(-1e9)
    value = neg_cent * mask
    t_ys = jnp.sum(mask[:, :, 0], axis=1).astype(jnp.int32)      # (B,)
    t_xs = jnp.sum(mask[:, 0, :], axis=1).astype(jnp.int32)      # (B,)
    x_idx = jnp.arange(Tx, dtype=jnp.int32)

    # ---- forward DP over spec frames y (vectorized over batch and x) ----
    def fwd_step(prev, row_y):
        row, y = row_y                                           # (B,Tx), scalar
        v_cur = jnp.where(x_idx[None, :] == y, NEG, prev)
        shifted = jnp.concatenate(
            [jnp.full((B, 1), NEG, jnp.float32), prev[:, :-1]], axis=1)
        v_prev = jnp.where(x_idx[None, :] == 0,
                           jnp.where(y == 0, jnp.float32(0.0), NEG),
                           shifted)
        new = jnp.maximum(v_cur, v_prev) + row
        return new, new

    rows = jnp.transpose(value, (1, 0, 2))                       # (Ty, B, Tx)
    ys = jnp.arange(Ty, dtype=jnp.int32)
    _, all_rows = lax.scan(fwd_step, jnp.full((B, Tx), NEG, jnp.float32), (rows, ys))
    V = jnp.transpose(all_rows, (1, 0, 2))                       # (B, Ty, Tx)

    # ---- backtrack (per batch, sequential over y, vectorized over batch) ----
    def bwd_step(i, carry):
        path, index = carry
        y = Ty - 1 - i
        active = y < t_ys                                        # (B,)
        onehot = (x_idx[None, :] == index[:, None]).astype(jnp.float32)
        row = jnp.where(active[:, None], onehot, 0.0)
        path = lax.dynamic_update_slice(path, row[:, None, :], (0, y, 0))
        ym1 = jnp.maximum(y - 1, 0)
        prev_row = lax.dynamic_slice_in_dim(V, ym1, 1, axis=1)[:, 0, :]   # (B,Tx)
        v_at = jnp.take_along_axis(prev_row, index[:, None], axis=1)[:, 0]
        idxm1 = jnp.maximum(index - 1, 0)
        v_at_m1 = jnp.take_along_axis(prev_row, idxm1[:, None], axis=1)[:, 0]
        dec = active & (index != 0) & ((index == y) | (v_at < v_at_m1))
        return path, index - dec.astype(jnp.int32)

    path0 = jnp.zeros((B, Ty, Tx), jnp.float32)
    path, _ = lax.fori_loop(0, Ty, bwd_step, (path0, t_xs - 1))
    return path


def rand_slice_segments(x, x_lengths, segment_size, key):
    B, D, T = x.shape
    ids_str_max = (x_lengths - segment_size + 1).astype(jnp.float32)
    ids_str = (jax.random.uniform(key, (B,)) * ids_str_max).astype(jnp.int32)

    def slice_one(xb, s):
        return lax.dynamic_slice(xb, (0, s), (D, segment_size))

    segs = jax.vmap(slice_one)(x, ids_str)
    return segs, ids_str


# ----------------------------------------------------------------------------- #
# SynthesizerTrn.forward (n_speakers=0 -> g=None, use_sdp=False)
# ----------------------------------------------------------------------------- #
def synthesizer_forward(params, cfg, tokens, x_lengths, y, y_lengths, key):
    x, m_p, logs_p, x_mask = text_encoder(params["enc_p"], tokens, x_lengths, cfg)

    k_post, k_slice = jax.random.split(key)
    z, m_q, logs_q, y_mask = posterior_encoder(params["enc_q"], y, y_lengths, k_post, cfg)
    z_p = flow_forward(params["flow"], z, y_mask, cfg)

    # --- alignment block (torch.no_grad) ---
    neg_cent = pallas_neg_cent(z_p, m_p, logs_p)                      # (B, Ty, Tx)
    attn_mask = x_mask[:, :, None, :] * y_mask[:, :, :, None]         # (B,1,Ty,Tx)
    attn = maximum_path(neg_cent, attn_mask[:, 0])[:, None]           # (B,1,Ty,Tx)

    w = attn.sum(2)                                                   # (B,1,Tx)
    logw_ = jnp.log(w + 1e-6) * x_mask
    logw = duration_predictor(params["dp"], x, x_mask)
    l_length = jnp.sum((logw - logw_) ** 2, axis=(1, 2)) / jnp.sum(x_mask)

    # expand m_p and logs_p with a single batched Pallas matmul
    attn_sq = attn[:, 0]
    m_ls = jnp.concatenate([m_p, logs_p], axis=1)                     # (B, 2C, Tx)
    expanded = pallas_bmm(attn_sq, m_ls.transpose(0, 2, 1)).transpose(0, 2, 1)
    m_p_exp, logs_p_exp = jnp.split(expanded, 2, axis=1)

    z_slice, ids_slice = rand_slice_segments(z, y_lengths, cfg["segment_size"], k_slice)
    o = generator(params["dec"], z_slice, cfg)
    return o, l_length, attn, ids_slice, x_mask, y_mask, (z, z_p, m_p_exp, logs_p_exp, m_q, logs_q)


# ----------------------------------------------------------------------------- #
# Deterministic parameter construction
# ----------------------------------------------------------------------------- #
class ParamGen:
    def __init__(self, key):
        self.key = key

    def next(self, shape, scale=0.1):
        self.key, sub = jax.random.split(self.key)
        return scale * jax.random.normal(sub, shape, dtype=jnp.float32)


def conv_p(pg, cin, cout, k, bias=True):
    return {"w": pg.next((cout, cin, k)), "b": pg.next((cout,)) if bias else None}


def norm_p(ch):
    return {"g": jnp.ones((ch,), jnp.float32), "b": jnp.zeros((ch,), jnp.float32)}


def wn_p(pg, hidden, kernel, dilation_rate, n_layers):
    p = {"in": [], "rs": [], "dil": [], "pad": []}
    for i in range(n_layers):
        d = dilation_rate ** i
        p["in"].append(conv_p(pg, hidden, 2 * hidden, kernel))
        out_c = 2 * hidden if i < n_layers - 1 else hidden
        p["rs"].append(conv_p(pg, hidden, out_c, 1))
        p["dil"].append(d)
        p["pad"].append((kernel * d - d) // 2)
    return p


def build_params(cfg, key):
    pg = ParamGen(key)
    h, f, inter = cfg["hidden_channels"], cfg["filter_channels"], cfg["inter_channels"]
    k = cfg["kernel_size"]

    enc_p = {
        "emb": pg.next((cfg["n_vocab"], h), scale=h ** -0.5),
        "encoder": {"layers": [
            {"attn": {"q": conv_p(pg, h, h, 1), "k": conv_p(pg, h, h, 1),
                      "v": conv_p(pg, h, h, 1), "o": conv_p(pg, h, h, 1)},
             "n1": norm_p(h),
             "ffn": {"c1": conv_p(pg, h, f, k), "c2": conv_p(pg, f, h, k)},
             "n2": norm_p(h)}
            for _ in range(cfg["n_layers"])]},
        "proj": conv_p(pg, h, 2 * inter, 1),
    }

    enc_q = {
        "pre": conv_p(pg, cfg["spec_channels"], h, 1),
        "wn": wn_p(pg, h, 5, 1, 16),
        "proj": conv_p(pg, h, 2 * inter, 1),
    }

    half = inter // 2
    flow = {"layers": [
        {"pre": conv_p(pg, half, h, 1),
         "wn": wn_p(pg, h, 5, 1, 4),
         "post": conv_p(pg, h, half, 1)}
        for _ in range(4)]}

    dp = {
        "c1": conv_p(pg, h, 256, 3), "n1": norm_p(256),
        "c2": conv_p(pg, 256, 256, 3), "n2": norm_p(256),
        "proj": conv_p(pg, 256, 1, 1),
    }

    up_init = cfg["upsample_initial_channel"]
    dec = {"pre": conv_p(pg, inter, up_init, 7), "ups": [], "res": []}
    for i, (u, uk) in enumerate(zip(cfg["upsample_rates"], cfg["upsample_kernel_sizes"])):
        cin = up_init // (2 ** i)
        cout = up_init // (2 ** (i + 1))
        dec["ups"].append({"w": pg.next((cin, cout, uk)), "b": pg.next((cout,))})
        for rk, rd in zip(cfg["resblock_kernel_sizes"], cfg["resblock_dilation_sizes"]):
            dec["res"].append({"convs": [conv_p(pg, cout, cout, rk) for _ in rd]})
    ch_final = up_init // (2 ** len(cfg["upsample_rates"]))
    dec["post"] = conv_p(pg, ch_final, 1, 7, bias=False)

    return {"enc_p": enc_p, "enc_q": enc_q, "flow": flow, "dp": dp, "dec": dec}


# ----------------------------------------------------------------------------- #
# main
# ----------------------------------------------------------------------------- #
if __name__ == "__main__":
    cfg = dict(
        n_vocab=40, spec_channels=20, segment_size=8,
        inter_channels=8, hidden_channels=16, filter_channels=32,
        n_heads=2, n_layers=2, kernel_size=3, p_dropout=0.1,
        resblock="2", resblock_kernel_sizes=[3], resblock_dilation_sizes=[[1, 3]],
        upsample_rates=[2, 2], upsample_initial_channel=16, upsample_kernel_sizes=[4, 4],
        n_speakers=0, gin_channels=0, use_sdp=False,
    )

    root = jax.random.PRNGKey(0)
    k_param, k_tok, k_spec, k_fwd = jax.random.split(root, 4)

    params = build_params(cfg, k_param)

    B, T_x, T_y = 2, 8, 16
    tokens = jax.random.randint(k_tok, (B, T_x), 0, cfg["n_vocab"])
    x_lengths = jnp.array([8, 6], dtype=jnp.int32)
    y = jax.random.normal(k_spec, (B, cfg["spec_channels"], T_y), dtype=jnp.float32)
    y_lengths = jnp.array([16, 12], dtype=jnp.int32)

    outs = synthesizer_forward(params, cfg, tokens, x_lengths, y, y_lengths, k_fwd)
    o, l_length, attn, ids_slice, x_mask, y_mask, latents = outs

    jax.block_until_ready(o)
    jax.block_until_ready(l_length)
    jax.block_until_ready(latents)

    assert o.shape == (B, 1, cfg["segment_size"] * 4)            # 2x2 upsampling
    assert l_length.shape == (B,)
    assert attn.shape == (B, 1, T_y, T_x)
    assert latents[2].shape == (B, cfg["inter_channels"], T_y)   # expanded m_p
    assert bool(jnp.all(jnp.isfinite(o)))

    print("KERNEL_OK")
</pallas_src>

<mosaic_0001>
module attributes {stable_mosaic.version = 11 : i64} {
  func.func @kernel(%arg0: i32, %arg1: memref<1x16x8xf32, #tpu.memory_space<vmem>>, %arg2: memref<1x48x16xbf16, #tpu.memory_space<vmem>>, %arg3: memref<48x1xf32, #tpu.memory_space<vmem>>, %arg4: memref<1x48x8xf32, #tpu.memory_space<vmem>>) attributes {dimension_semantics = [#tpu.dimension_semantics<parallel>], iteration_bounds = array<i64: 2>, scalar_prefetch = 0 : i64, scratch_operands = 0 : i64, tpu.core_type = #tpu.core_type<tc>, window_params = [{transform_indices = @transform_0, window_bounds = array<i64: 1, 16, 8>}, {pipeline_mode = #tpu.pipeline_mode<synchronous>, transform_indices = @transform_1, window_bounds = array<i64: 1, 48, 16>}, {pipeline_mode = #tpu.pipeline_mode<synchronous>, transform_indices = @transform_2, window_bounds = array<i64: 48, 1>}, {transform_indices = @transform_3, window_bounds = array<i64: 1, 48, 8>}]} {
    %c0 = arith.constant 0 : index
    %c0_0 = arith.constant 0 : index
    %c0_1 = arith.constant 0 : index
    %0 = vector.load %arg1[%c0, %c0_0, %c0_1] : memref<1x16x8xf32, #tpu.memory_space<vmem>>, vector<1x16x8xf32>
    %1 = vector.shape_cast %0 : vector<1x16x8xf32> to vector<16x8xf32>
    %2 = arith.truncf %1 : vector<16x8xf32> to vector<16x8xbf16>
    %c0_2 = arith.constant 0 : index
    %c0_3 = arith.constant 0 : index
    %c0_4 = arith.constant 0 : index
    %3 = vector.load %arg2[%c0_2, %c0_3, %c0_4] : memref<1x48x16xbf16, #tpu.memory_space<vmem>>, vector<1x48x16xbf16>
    %4 = vector.shape_cast %3 : vector<1x48x16xbf16> to vector<48x16xbf16>
    %cst = arith.constant dense<0.000000e+00> : vector<48x8xf32>
    %5 = tpu.matmul %4, %2, %cst {dimension_numbers = #tpu.dot_dimension_numbers<[1], [0], [0], [1], [0, 0, 1, 1], [], []>} : vector<48x16xbf16>, vector<16x8xbf16>, vector<48x8xf32> -> vector<48x8xf32>
    %c0_5 = arith.constant 0 : index
    %c0_6 = arith.constant 0 : index
    %6 = vector.load %arg3[%c0_5, %c0_6] : memref<48x1xf32, #tpu.memory_space<vmem>>, vector<48x1xf32>
    %7 = vector.broadcast %6 : vector<48x1xf32> to vector<48x8xf32>
    %8 = arith.addf %5, %7 : vector<48x8xf32>
    %c0_7 = arith.constant 0 : index
    %c0_8 = arith.constant 0 : index
    %c0_9 = arith.constant 0 : index
    %9 = vector.load %arg4[%c0_7, %c0_8, %c0_9] : memref<1x48x8xf32, #tpu.memory_space<vmem>>, vector<1x48x8xf32>
    %10 = vector.shape_cast %9 : vector<1x48x8xf32> to vector<48x8xf32>
    %11 = vector.shape_cast %8 : vector<48x8xf32> to vector<1x48x8xf32>
    tpu.vector_store %arg4[%c0_7, %c0_8, %c0_9], %11 {strides = array<i32>} : memref<1x48x8xf32, #tpu.memory_space<vmem>>, vector<1x48x8xf32>,
    return
  }
  func.func @transform_0(%arg0: i32) -> (i32, i32, i32) {
    %c0_i32 = arith.constant 0 : i32
    %c0_i32_0 = arith.constant 0 : i32
    %c0_i32_1 = arith.constant 0 : i32
    return %arg0, %c0_i32, %c0_i32_0 : i32, i32, i32
  }
  func.func @transform_1(%arg0: i32) -> (i32, i32, i32) {
    %c0_i32 = arith.constant 0 : i32
    %c0_i32_0 = arith.constant 0 : i32
    %c0_i32_1 = arith.constant 0 : i32
    %c0_i32_2 = arith.constant 0 : i32
    return %c0_i32, %c0_i32_0, %c0_i32_1 : i32, i32, i32
  }
  func.func @transform_2(%arg0: i32) -> (i32, i32) {
    %c0_i32 = arith.constant 0 : i32
    %c0_i32_0 = arith.constant 0 : i32
    %c0_i32_1 = arith.constant 0 : i32
    return %c0_i32, %c0_i32_0 : i32, i32
  }
  func.func @transform_3(%arg0: i32) -> (i32, i32, i32) {
    %c0_i32 = arith.constant 0 : i32
    %c0_i32_0 = arith.constant 0 : i32
    %c0_i32_1 = arith.constant 0 : i32
    return %arg0, %c0_i32, %c0_i32_0 : i32, i32, i32
  }
}

</mosaic_0001>

<llo_original>
// kernel: tpu_custom_call.1
$region0: #{tpu_custom_call.1}
  #allocation0 [shape = 'u32[]', space=smem, size = 0x4, offset = 0x4, fixed_abs, tag = 'smem constant byte address 0x4 - core index']
  #allocation1 [shape = 'u32[72,128]{1,0:T(1,128)}', space=vmem, size = 0x9000, scoped, tag = 'internal scratch']
  %s0 = inlined_call_operand.vmem [shape: f32[2,16,8], index: 0, kind: input, shape index: {}]
  %s1 = inlined_call_operand.vmem [shape: bf16[1,48,16], index: 1, kind: input, shape index: {}]
  %s2 = inlined_call_operand.vmem [shape: f32[48,1], index: 2, kind: input, shape index: {}]
  %s3 = inlined_call_operand.vmem [shape: f32[2,48,8], index: 3, kind: output, shape index: {}]
  %s4 = sld [smem:[#allocation0]]
  $region45: #{tpu_custom_call.1} parent=0
    _
  %s6 = ssub.s32 1, %s4
  %s7 = scalar_select 0, %s6, %s4
  loop: start=0, step=1, limit=4
  $region2: #{tpu_custom_call.1} parent=0 // loop_pre_header
    _
  $region3: #{tpu_custom_call.1} parent=0 // loop_header
    %s9 = sphi 0, %s13
    %p10 = scmp.ge.s32.totalorder %s9, 4
    %s19 = sphi 0, %s21
    %s22 = sphi 0, %s19
    %s23 = sphi 0, %s22
    %s39 = sphi 0, %s23
    %s43 = sphi 0, %s43
    %s45 = sphi 0, %s43
    %s46 = sphi 0, %s45
    %s60 = sphi 0, %s46
    %s64 = sphi 0, %s64
    %s66 = sphi 0, %s64
    %s67 = sphi 0, %s66
    %s81 = sphi 0, %s67
    %s87 = sphi 0, %s89
    %s90 = sphi 0, %s87
    %s91 = sphi 0, %s90
    %s107 = sphi 0, %s91
  $region4: #{tpu_custom_call.1} parent=0 // loop_header_branch
    %12 = sbr.rel (%p10) target = $region8
  $region5: #{tpu_custom_call.1} parent=0 // loop_body
    %s14 = ssub.s32 %s9, 1
    %s15 = ssub.s32 %s9, 2
    %s16 = sadd.s32 %s9, 1
    %s17 = ssub.s32 %s9, %s16
    %p18 = scmp.eq.s32.totalorder %s17, 0
    %s20 = sadd.s32 %s19, 1
    %s21 = scalar_select %p18, %s19, %s20
    %p24 = pneg %p18
    %p25 = scmp.eq.s32.totalorder %s9, 1
    %p26 = por %p24, %p25
    %p27 = scmp.ne.s32.totalorder %s19, %s22
    %p28 = scmp.eq.s32.totalorder %s9, 0
    %p29 = por %p27, %p28
    %p30 = scmp.ne.s32.totalorder %s19, %s22
    %p31 = scmp.eq.s32.totalorder %s14, 1
    %p32 = por %p30, %p31
    %p33 = scmp.ne.s32.totalorder %s22, %s23
    %p34 = scmp.eq.s32.totalorder %s14, 0
    %p35 = por %p33, %p34
    %p36 = scmp.ne.s32.totalorder %s22, %s23
    %p37 = scmp.eq.s32.totalorder %s15, 1
    %p38 = por %p36, %p37
    %p40 = scmp.ne.s32.totalorder %s23, %s39
    %p41 = scmp.eq.s32.totalorder %s15, 0
    %p42 = por %p40, %p41
    %s44 = sadd.s32 %s43, 1
    %p47 = scmp.eq.s32.totalorder %s9, 1
    %p48 = scmp.ne.s32.totalorder %s43, %s45
    %p49 = scmp.eq.s32.totalorder %s9, 0
    %p50 = por %p48, %p49
    %p51 = scmp.ne.s32.totalorder %s43, %s45
    %p52 = scmp.eq.s32.totalorder %s14, 1
    %p53 = por %p51, %p52
    %p54 = scmp.ne.s32.totalorder %s45, %s46
    %p55 = scmp.eq.s32.totalorder %s14, 0
    %p56 = por %p54, %p55
    %p57 = scmp.ne.s32.totalorder %s45, %s46
    %p58 = scmp.eq.s32.totalorder %s15, 1
    %p59 = por %p57, %p58
    %p61 = scmp.ne.s32.totalorder %s46, %s60
    %p62 = scmp.eq.s32.totalorder %s15, 0
    %p63 = por %p61, %p62
    %s65 = sadd.s32 %s64, 1
    %p68 = scmp.eq.s32.totalorder %s9, 1
    %p69 = scmp.ne.s32.totalorder %s64, %s66
    %p70 = scmp.eq.s32.totalorder %s9, 0
    %p71 = por %p69, %p70
    %p72 = scmp.ne.s32.totalorder %s64, %s66
    %p73 = scmp.eq.s32.totalorder %s14, 1
    %p74 = por %p72, %p73
    %p75 = scmp.ne.s32.totalorder %s66, %s67
    %p76 = scmp.eq.s32.totalorder %s14, 0
    %p77 = por %p75, %p76
    %p78 = scmp.ne.s32.totalorder %s66, %s67
    %p79 = scmp.eq.s32.totalorder %s15, 1
    %p80 = por %p78, %p79
    %p82 = scmp.ne.s32.totalorder %s67, %s81
    %p83 = scmp.eq.s32.totalorder %s15, 0
    %p84 = por %p82, %p83
    %s85 = ssub.s32 %s9, %s16
    %p86 = scmp.eq.s32.totalorder %s85, 0
    %s88 = sadd.s32 %s87, 1
    %s89 = scalar_select %p86, %s87, %s88
    %p92 = pneg %p86
    %p93 = scmp.eq.s32.totalorder %s9, 1
    %p94 = por %p92, %p93
    %p95 = scmp.ne.s32.totalorder %s87, %s90
    %p96 = scmp.eq.s32.totalorder %s9, 0
    %p97 = por %p95, %p96
    %p98 = scmp.ne.s32.totalorder %s87, %s90
    %p99 = scmp.eq.s32.totalorder %s14, 1
    %p100 = por %p98, %p99
    %p101 = scmp.ne.s32.totalorder %s90, %s91
    %p102 = scmp.eq.s32.totalorder %s14, 0
    %p103 = por %p101, %p102
    %p104 = scmp.ne.s32.totalorder %s90, %s91
    %p105 = scmp.eq.s32.totalorder %s15, 1
    %p106 = por %p104, %p105
    %p108 = scmp.ne.s32.totalorder %s91, %s107
    %p109 = scmp.eq.s32.totalorder %s15, 0
    %p110 = por %p108, %p109
    %p111 = scmp.le.s32.totalorder 1, %s9
    %p112 = scmp.lt.s32.totalorder %s9, 3
    %p113 = pnand %p111, %p112
    %p114 = pneg %p113
    // Predicated region
    $region9: #{tpu_custom_call.1} parent=5 // pred_check
      _
    $region10: #{tpu_custom_call.1} parent=5 // pred_check_branch
      %116 = sbr.rel (%p113) target = $region12
    $region11: #{tpu_custom_call.1} parent=5 // pred_region
      %s117 = ssub.s32 %s9, 1
      // Predicated region
      $region13: #{tpu_custom_call.1} parent=11 // pred_check
        %p118 = pneg %p56
      $region14: #{tpu_custom_call.1} parent=11 // pred_check_branch
        %120 = sbr.rel (%p118) target = $region16
      $region15: #{tpu_custom_call.1} parent=11 // pred_region
        _
      $region16: #{tpu_custom_call.1} parent=11 // pred_fallthru
        _
      // Predicated region
      $region17: #{tpu_custom_call.1} parent=11 // pred_check
        %p121 = pneg %p77
      $region18: #{tpu_custom_call.1} parent=11 // pred_check_branch
        %123 = sbr.rel (%p121) target = $region20
      $region19: #{tpu_custom_call.1} parent=11 // pred_region
        _
      $region20: #{tpu_custom_call.1} parent=11 // pred_fallthru
        _
    $region12: #{tpu_custom_call.1} parent=5 // pred_fallthru
      _
    %p124 = scmp.lt.s32.totalorder %s9, 2
    // Predicated region
    $region21: #{tpu_custom_call.1} parent=5 // pred_check
      %p125 = pneg %p124
    $region22: #{tpu_custom_call.1} parent=5 // pred_check_branch
      %127 = sbr.rel (%p125) target = $region24
    $region23: #{tpu_custom_call.1} parent=5 // pred_region
      // Predicated region
      $region25: #{tpu_custom_call.1} parent=23 // pred_check
        %p128 = pneg %p29
      $region26: #{tpu_custom_call.1} parent=23 // pred_check_branch
        %130 = sbr.rel (%p128) target = $region28
      $region27: #{tpu_custom_call.1} parent=23 // pred_region
        %p131 = scmp.lt.s32.totalorder %s9, 1
        %s132 = scalar_select %p131, %s9, 1
        %s133 = smul.addr %s132, 2
        %s134 = smul.addr %s133, 8
        %s135 = scalar_lea.vmem %s0, %s134
      $region28: #{tpu_custom_call.1} parent=23 // pred_fallthru
        _
    $region24: #{tpu_custom_call.1} parent=5 // pred_fallthru
      _
    %p136 = scmp.le.s32.totalorder 1, %s9
    %p137 = scmp.lt.s32.totalorder %s9, 3
    %p138 = pnand %p136, %p137
    %p139 = pneg %p138
    // Predicated region
    $region29: #{tpu_custom_call.1} parent=5 // pred_check
      _
    $region30: #{tpu_custom_call.1} parent=5 // pred_check_branch
      %141 = sbr.rel (%p138) target = $region32
    $region31: #{tpu_custom_call.1} parent=5 // pred_region
      %s142 = ssub.s32 %s9, 1
      %p143 = scmp.lt.s32.totalorder %s14, 1
      %s144 = scalar_select %p143, %s14, 1
      %s145 = smul.addr %s144, 2
      %s146 = smul.addr %s145, 8
      %s147 = scalar_lea.vmem %s0, %s146
      %p148 = pneg %p35
      %p149 = pneg %p32
      %p150 = pneg %p56
      %p151 = pneg %p53
      %p152 = pneg %p77
      %p153 = pneg %p74
      %p154 = pneg %p103
      %p155 = pneg %p100
      %p156 = scmp.lt.s32.totalorder %s14, 1
      %s157 = scalar_select %p156, %s14, 1
      %s158 = smul.addr %s157, 6
      %s159 = smul.addr %s158, 8
      %s160 = scalar_lea.vmem %s3, %s159
      %p161 = scmp.lt.s32.totalorder %s14, 1
      %s162 = scalar_select %p161, %s14, 1
      %s163 = smul.addr %s162, 2
      %s164 = smul.addr %s163, 8
      %s165 = scalar_lea.vmem %s0, %s164
      %p166 = scmp.lt.s32.totalorder %s14, 1
      %s167 = scalar_select %p166, %s14, 1
      %s168 = smul.addr %s167, 6
      %s169 = smul.addr %s168, 8
      %s170 = scalar_lea.vmem %s3, %s169
      %v172 = vld [vmem:[%s165] sm:$0xff]
      %v173 = vld [vmem:[%s165 + $0x8] sm:$0xff]
      %v174 = vpack.c.bf16 %v173, %v172
      %v175 = vld [vmem:[%s1] sm:$0xf]
      %v176 = vld [vmem:[%s1 + $0x4] sm:$0xf]
      %v177 = vld [vmem:[%s1 + $0x8] sm:$0xf]
      %v178 = vld [vmem:[%s1 + $0xc] sm:$0xf]
      %v179 = vld [vmem:[%s1 + $0x10] sm:$0xf]
      %v180 = vld [vmem:[%s1 + $0x14] sm:$0xf]
      %v181 = vld [vmem:[%s2] sm:$0xff]
      %v182 = vld [vmem:[%s2 + $0x8] sm:$0xff]
      %v183 = vld [vmem:[%s2 + $0x10] sm:$0xff]
      %v184 = vld [vmem:[%s2 + $0x18] sm:$0xff]
      %v185 = vld [vmem:[%s2 + $0x20] sm:$0xff]
      %v186 = vld [vmem:[%s2 + $0x28] sm:$0xff]
      %188 = vset.pattern.permute.xlu0 0
      %189 = vperm.xlu0 %188, %v181
      %v190 = vpop.permute.xlu0 %189
      %193 = vset.pattern.permute.xlu0 0
      %194 = vperm.xlu0 %193, %v182
      %v195 = vpop.permute.xlu0 %194
      %198 = vset.pattern.permute.xlu0 0
      %199 = vperm.xlu0 %198, %v183
      %v200 = vpop.permute.xlu0 %199
      %203 = vset.pattern.permute.xlu0 0
      %204 = vperm.xlu0 %203, %v184
      %v205 = vpop.permute.xlu0 %204
      %208 = vset.pattern.permute.xlu0 0
      %209 = vperm.xlu0 %208, %v185
      %v210 = vpop.permute.xlu0 %209
      %213 = vset.pattern.permute.xlu0 0
      %214 = vperm.xlu0 %213, %v186
      %v215 = vpop.permute.xlu0 %214
      %v223 = vunpack.c.l.b16 %v175
      %v224 = vunpack.c.l.b16 %v176
      %v225 = vunpack.c.l.b16 %v177
      %v226 = vunpack.c.l.b16 %v178
      %v227 = vunpack.c.l.b16 %v179
      %v228 = vunpack.c.l.b16 %v180
      %v229 = vpack.c.b16 %v224, %v223
      %v230 = vpack.c.b16 %v226, %v225
      %v231 = vpack.c.b16 %v228, %v227
      %vm232 = vcmask 130048
      %v234 = vsel %vm232, %v229, 0
      %v237 = vsel %vm232, %v230, 0
      %v240 = vsel %vm232, %v231, 0
      %242 = vmatpush.bf16.msra.mxu0 0
      %243 = vmatpush.bf16.msra.mxu0 0
      %244 = vmatpush.bf16.msra.mxu0 0
      %245 = vmatpush.bf16.msra.mxu0 0
      %246 = vmatpush.bf16.msra.mxu0 0
      %247 = vmatpush.bf16.msra.mxu0 0
      %248 = vmatpush.bf16.msra.mxu0 0
      %249 = vmatpush.bf16.msra.mxu0 %v174
      %250 = vmatmul.bf16.gmra.mxu0 %v234
      %v251 = vpop.f32.mrf.mxu0
      %v252 = vadd.f32 %v190, %v251
      %v253 = vpop.f32.mrf.mxu0
      %v254 = vadd.f32 %v195, %v253
      %255 = vmatmul.bf16.gmra.mxu0 %v237
      %v256 = vpop.f32.mrf.mxu0
      %v257 = vadd.f32 %v200, %v256
      %v258 = vpop.f32.mrf.mxu0
      %v259 = vadd.f32 %v205, %v258
      %260 = vmatmul.bf16.gmra.mxu0 %v240
      %v261 = vpop.f32.mrf.mxu0
      %v262 = vadd.f32 %v210, %v261
      %v263 = vpop.f32.mrf.mxu0
      %v264 = vadd.f32 %v215, %v263
      %265 = vdwg.mxu0
      %vm266 = vcmask 64512
      %267 = vst.msk [vmem:[%s170] sm:$0xff] %vm266, %v252
      %268 = vst.msk [vmem:[%s170 + $0x8] sm:$0xff] %vm266, %v254
      %269 = vst.msk [vmem:[%s170 + $0x10] sm:$0xff] %vm266, %v257
      %270 = vst.msk [vmem:[%s170 + $0x18] sm:$0xff] %vm266, %v259
      %271 = vst.msk [vmem:[%s170 + $0x20] sm:$0xff] %vm266, %v262
      %272 = vst.msk [vmem:[%s170 + $0x28] sm:$0xff] %vm266, %v264
      %p273 = scmp.lt.s32.totalorder %s14, 1
      %s274 = scalar_select %p273, %s14, 1
      %s275 = smul.addr %s274, 6
      %s276 = smul.addr %s275, 8
      %s277 = scalar_lea.vmem %s3, %s276
      // Predicated region
      $region33: #{tpu_custom_call.1} parent=31 // pred_check
        %p278 = pneg %p100
      $region34: #{tpu_custom_call.1} parent=31 // pred_check_branch
        %280 = sbr.rel (%p278) target = $region36
      $region35: #{tpu_custom_call.1} parent=31 // pred_region
        _
      $region36: #{tpu_custom_call.1} parent=31 // pred_fallthru
        _
    $region32: #{tpu_custom_call.1} parent=5 // pred_fallthru
      _
    %p281 = scmp.le.s32.totalorder 2, %s9
    // Predicated region
    $region37: #{tpu_custom_call.1} parent=5 // pred_check
      %p282 = pneg %p281
    $region38: #{tpu_custom_call.1} parent=5 // pred_check_branch
      %284 = sbr.rel (%p282) target = $region40
    $region39: #{tpu_custom_call.1} parent=5 // pred_region
      %s285 = ssub.s32 %s9, 2
      // Predicated region
      $region41: #{tpu_custom_call.1} parent=39 // pred_check
        %p286 = pneg %p106
      $region42: #{tpu_custom_call.1} parent=39 // pred_check_branch
        %288 = sbr.rel (%p286) target = $region44
      $region43: #{tpu_custom_call.1} parent=39 // pred_region
        %p289 = scmp.lt.s32.totalorder %s15, 1
        %s290 = scalar_select %p289, %s15, 1
        %s291 = smul.addr %s290, 6
        %s292 = smul.addr %s291, 8
        %s293 = scalar_lea.vmem %s3, %s292
      $region44: #{tpu_custom_call.1} parent=39 // pred_fallthru
        _
    $region40: #{tpu_custom_call.1} parent=5 // pred_fallthru
      _
  $region6: #{tpu_custom_call.1} parent=0 // loop_footer
    %s13 = sadd.s32 1, %s9
  $region7: #{tpu_custom_call.1} parent=0 // loop_footer_branch
    %8 = sbr.rel target = $region3
  $region8: #{tpu_custom_call.1} parent=0 // loop_exit
    _

</llo_original>
